<compile_context>
chip_gen: v7x
topology: tpu7x:2x2x1
jax: 0.10.0
libtpu: 0.0.40
codegen_flags: <defaults>
</compile_context>

<pallas_src>
import functools
import math

import jax
import jax.numpy as jnp
from jax.experimental import pallas as pl
from jax.experimental.pallas import tpu as pltpu


def _round_up(n, m):
    return (n + m - 1) // m * m


def _sigmoid(x):
    # One EUP tanh instead of exp + full-precision divide.
    return 0.5 * jnp.tanh(0.5 * x) + 0.5


def _pad_last(a, target):
    pad = target - a.shape[-1]
    if pad == 0:
        return a
    return jnp.pad(a, [(0, 0)] * (a.ndim - 1) + [(0, pad)])


def _tpu_generation():
    try:
        kind = jax.devices()[0].device_kind.lower()
    except Exception:
        return None
    for tag in ("v7", "v6", "v5"):
        if tag in kind:
            return tag
    return None


def _pick_batch_block(B, gen):
    if gen == "v7":
        # 2 TensorCores per chip: prefer an even number of >=2 grid steps so
        # both cores get equal batch shards under dimension_semantics=parallel.
        for tb in (256, 128, 64, 32, 16, 8):
            if B % tb == 0 and B // tb >= 2 and (B // tb) % 2 == 0:
                return tb
        for tb in (256, 128, 64, 32, 16, 8):
            if B % tb == 0 and B // tb >= 2:
                return tb
        return B
    # Single-TC chips (v5e/v6e): the grid is a serial loop -- never split small
    # batches; only cap the block so the f32 gate temporaries stay bounded.
    for tb in (512, 256):
        if B > tb and B % tb == 0:
            return tb
    return B


def _vmem_limit_bytes(est, gen):
    # Leave headroom under the physical per-TC VMEM (64 MiB on v7x, 128 MiB
    # on v5e/v6e) instead of requesting the whole thing.
    cap = (56 << 20) if gen == "v7" else (100 << 20)
    return int(min(cap, max(32 << 20, est + (4 << 20))))


# ---------------------------------------------------------------------------
# One-time weight preparation (per layer, NOT per timestep)
# ---------------------------------------------------------------------------
def prepare_lstm_weights(w_ih, w_hh, b_ih=None, b_hh=None, *,
                         matmul_dtype=jnp.bfloat16):
    """Transpose (4H,K)->(K,4Hp), pad each gate block to Hp=round_up(H,128),
    pad the input width to INp=round_up(IN,128), stack W_ih^T over W_hh^T
    along K into one matmul weight, pre-sum the biases, cast to bf16."""
    w_ih = jnp.asarray(w_ih, jnp.float32)
    w_hh = jnp.asarray(w_hh, jnp.float32)
    four_h, IN = w_ih.shape
    H = w_hh.shape[1]
    assert four_h == 4 * H and w_hh.shape == (4 * H, H)
    Hp = _round_up(H, 128)
    INp = _round_up(IN, 128)

    wih = w_ih.reshape(4, H, IN)
    whh = w_hh.reshape(4, H, H)
    bias = jnp.zeros((4, H), jnp.float32)
    if b_ih is not None:
        bias = bias + jnp.asarray(b_ih, jnp.float32).reshape(4, H)
    if b_hh is not None:
        bias = bias + jnp.asarray(b_hh, jnp.float32).reshape(4, H)

    wih = jnp.pad(wih, ((0, 0), (0, Hp - H), (0, INp - IN)))
    whh = jnp.pad(whh, ((0, 0), (0, Hp - H), (0, Hp - H)))
    bias = jnp.pad(bias, ((0, 0), (0, Hp - H)))

    # (K, 4*Hp) so the kernels compute z @ W^T (== F.linear), one matmul.
    w_ih_t = wih.transpose(2, 0, 1).reshape(INp, 4 * Hp)
    w_hh_t = whh.transpose(2, 0, 1).reshape(Hp, 4 * Hp)
    w_z = jnp.concatenate([w_ih_t, w_hh_t], axis=0).astype(matmul_dtype)
    bias = bias.reshape(1, 4 * Hp)

    return dict(w_z=w_z, bias=bias, input_size=IN, hidden_size=H,
                input_padded=INp, hidden_padded=Hp)


# ---------------------------------------------------------------------------
# Kernels
# ---------------------------------------------------------------------------
def _lstm_cell_kernel(x_ref, hx_ref, cx_ref, *rest,
                      has_noise_in, has_noise_hidden):
    pos = 0
    nin_ref = nh_ref = None
    if has_noise_in:
        nin_ref = rest[pos]; pos += 1
    if has_noise_hidden:
        nh_ref = rest[pos]; pos += 1
    w_ref, b_ref, hy_ref, cy_ref, z_sc = rest[pos:pos + 5]

    Hp = hy_ref.shape[-1]
    INp = x_ref.shape[-1]

    # variational dropout (static branches; skipped entirely when disabled)
    x = x_ref[...]
    if has_noise_in:
        x = x * nin_ref[...]
    h = hx_ref[...]
    if has_noise_hidden:
        h = h * nh_ref[...]

    # pack [x | h] (lane-aligned copies) -> ONE bf16 MXU matmul, f32 accumulate
    z_sc[:, :INp] = x.astype(z_sc.dtype)
    z_sc[:, INp:] = h.astype(z_sc.dtype)
    gates = jnp.dot(z_sc[...], w_ref[...],
                    preferred_element_type=jnp.float32) + b_ref[...]

    ingate     = _sigmoid(gates[:, 0 * Hp:1 * Hp])
    forgetgate = _sigmoid(gates[:, 1 * Hp:2 * Hp])
    cellgate   = jnp.tanh(gates[:, 2 * Hp:3 * Hp])
    outgate    = _sigmoid(gates[:, 3 * Hp:4 * Hp])

    cy = forgetgate * cx_ref[...].astype(jnp.float32) + ingate * cellgate
    hy = outgate * jnp.tanh(cy)

    cy_ref[...] = cy.astype(cy_ref.dtype)     # f32 cell state
    hy_ref[...] = hy.astype(hy_ref.dtype)


def _lstm_seq_kernel(xs_ref, h0_ref, c0_ref, *rest,
                     has_noise_in, has_noise_hidden):
    pos = 0
    nin_ref = nh_ref = None
    if has_noise_in:
        nin_ref = rest[pos]; pos += 1
    if has_noise_hidden:
        nh_ref = rest[pos]; pos += 1
    w_ref, b_ref, hs_ref, cfin_ref, z_sc, h_sc, c_sc = rest[pos:pos + 7]

    t = pl.program_id(0)
    Hp = h_sc.shape[-1]
    INp = xs_ref.shape[-1]

    @pl.when(t == 0)
    def _():
        h_sc[...] = h0_ref[...].astype(jnp.float32)
        c_sc[...] = c0_ref[...].astype(jnp.float32)

    x = xs_ref[0]
    if has_noise_in:
        x = x * nin_ref[...]
    h_in = h_sc[...]
    if has_noise_hidden:
        h_in = h_in * nh_ref[...]

    z_sc[:, :INp] = x.astype(z_sc.dtype)
    z_sc[:, INp:] = h_in.astype(z_sc.dtype)
    gates = jnp.dot(z_sc[...], w_ref[...],
                    preferred_element_type=jnp.float32) + b_ref[...]

    ingate     = _sigmoid(gates[:, 0 * Hp:1 * Hp])
    forgetgate = _sigmoid(gates[:, 1 * Hp:2 * Hp])
    cellgate   = jnp.tanh(gates[:, 2 * Hp:3 * Hp])
    outgate    = _sigmoid(gates[:, 3 * Hp:4 * Hp])

    cy = forgetgate * c_sc[...] + ingate * cellgate
    hy = outgate * jnp.tanh(cy)

    c_sc[...] = cy
    h_sc[...] = hy
    hs_ref[0] = hy.astype(hs_ref.dtype)
    cfin_ref[...] = cy      # VMEM-resident output block; one HBM writeback


# ---------------------------------------------------------------------------
# Wrappers
# ---------------------------------------------------------------------------
def var_fast_lstm_cell(x, hx, cx, prepared, noise_in=None, noise_hidden=None):
    """Single-timestep cell (matches VarFastLSTMCell.forward)."""
    B, IN = x.shape
    H = prepared["hidden_size"]
    Hp = prepared["hidden_padded"]
    INp = prepared["input_padded"]
    assert IN == prepared["input_size"]
    assert hx.shape == (B, H) and cx.shape == (B, H)

    w_z = prepared["w_z"]
    bias = prepared["bias"]

    x_p = _pad_last(x, INp)
    hx_p = _pad_last(hx, Hp)
    cx_p = _pad_last(cx, Hp)
    has_nin = noise_in is not None
    has_nh = noise_hidden is not None
    nin_p = _pad_last(noise_in, INp) if has_nin else None
    nh_p = _pad_last(noise_hidden, Hp) if has_nh else None

    gen = _tpu_generation()
    tb = _pick_batch_block(B, gen)
    nb = B // tb

    row_in = pl.BlockSpec((tb, INp), lambda i: (i, 0))
    row_h = pl.BlockSpec((tb, Hp), lambda i: (i, 0))

    def fixed(shape):
        return pl.BlockSpec(shape, lambda i: (0,) * len(shape))

    inputs = [x_p, hx_p, cx_p]
    in_specs = [row_in, row_h, row_h]
    if has_nin:
        inputs.append(nin_p); in_specs.append(row_in)
    if has_nh:
        inputs.append(nh_p); in_specs.append(row_h)
    inputs += [w_z, bias]
    in_specs += [fixed(w_z.shape), fixed(bias.shape)]

    kernel = functools.partial(_lstm_cell_kernel,
                               has_noise_in=has_nin, has_noise_hidden=has_nh)

    Kz = INp + Hp
    est = (2 * w_z.size * w_z.dtype.itemsize + 2 * bias.size * 4
           + 2 * 4 * (tb * INp * (2 if has_nin else 1)
                      + tb * Hp * (2 + (1 if has_nh else 0)))
           + 2 * 4 * 2 * tb * Hp                 # hy + cy output blocks
           + tb * Kz * 2                         # z scratch (bf16)
           + 4 * tb * (4 * Hp + 6 * Hp))         # gates + gate-value temps
    vmem_limit = _vmem_limit_bytes(est, gen)

    hy, cy = pl.pallas_call(
        kernel,
        out_shape=(jax.ShapeDtypeStruct((B, Hp), x.dtype),
                   jax.ShapeDtypeStruct((B, Hp), jnp.float32)),
        grid=(nb,),
        in_specs=in_specs,
        out_specs=(row_h, row_h),
        scratch_shapes=[pltpu.VMEM((tb, Kz), w_z.dtype)],
        compiler_params=pltpu.CompilerParams(
            dimension_semantics=("parallel",),
            vmem_limit_bytes=vmem_limit),
    )(*inputs)

    return hy[:, :H], cy[:, :H]


def var_fast_lstm_sequence(xs, h0, c0, prepared,
                           noise_in=None, noise_hidden=None):
    """Fused recurrence: one pallas_call over grid=(T,), weights/masks
    VMEM-resident, h/c carried in f32 VMEM scratch, x_t streamed per step.
    The same variational-dropout masks are used at every timestep (matching
    reset_noise() being called once per sequence).
    Returns (hs (T,B,H), (h_T (B,H), c_T (B,H) in f32))."""
    T, B, IN = xs.shape
    H = prepared["hidden_size"]
    Hp = prepared["hidden_padded"]
    INp = prepared["input_padded"]
    assert IN == prepared["input_size"]
    assert h0.shape == (B, H) and c0.shape == (B, H)

    w_z = prepared["w_z"]
    bias = prepared["bias"]

    xs_p = _pad_last(xs, INp)            # padded once for the whole sequence
    h0_p = _pad_last(h0, Hp)
    c0_p = _pad_last(c0, Hp)
    has_nin = noise_in is not None
    has_nh = noise_hidden is not None
    nin_p = _pad_last(noise_in, INp) if has_nin else None
    nh_p = _pad_last(noise_hidden, Hp) if has_nh else None

    def fixed(shape):
        return pl.BlockSpec(shape, lambda t: (0,) * len(shape))

    xt_spec = pl.BlockSpec((1, B, INp), lambda t: (t, 0, 0))
    ht_spec = pl.BlockSpec((1, B, Hp), lambda t: (t, 0, 0))

    inputs = [xs_p, h0_p, c0_p]
    in_specs = [xt_spec, fixed((B, Hp)), fixed((B, Hp))]
    if has_nin:
        inputs.append(nin_p); in_specs.append(fixed((B, INp)))
    if has_nh:
        inputs.append(nh_p); in_specs.append(fixed((B, Hp)))
    inputs += [w_z, bias]
    in_specs += [fixed(w_z.shape), fixed(bias.shape)]

    kernel = functools.partial(_lstm_seq_kernel,
                               has_noise_in=has_nin, has_noise_hidden=has_nh)

    gen = _tpu_generation()
    Kz = INp + Hp
    est = (2 * w_z.size * w_z.dtype.itemsize + 2 * bias.size * 4
           + 2 * 4 * B * (INp + 2 * Hp)                    # x_t + h0/c0 blocks
           + (2 * 4 * B * INp if has_nin else 0)
           + (2 * 4 * B * Hp if has_nh else 0)
           + 2 * 4 * B * Hp * 2                            # hs block + c_final
           + B * Kz * 2 + 2 * 4 * B * Hp                   # z / h / c scratch
           + 4 * B * (4 * Hp + 6 * Hp))                    # gates + temporaries
    vmem_limit = _vmem_limit_bytes(est, gen)

    hs, c_fin = pl.pallas_call(
        kernel,
        out_shape=(jax.ShapeDtypeStruct((T, B, Hp), xs.dtype),
                   jax.ShapeDtypeStruct((B, Hp), jnp.float32)),
        grid=(T,),
        in_specs=in_specs,
        out_specs=(ht_spec, fixed((B, Hp))),
        scratch_shapes=[pltpu.VMEM((B, Kz), w_z.dtype),
                        pltpu.VMEM((B, Hp), jnp.float32),
                        pltpu.VMEM((B, Hp), jnp.float32)],
        compiler_params=pltpu.CompilerParams(
            dimension_semantics=("arbitrary",),      # recurrent across t
            vmem_limit_bytes=vmem_limit),
    )(*inputs)

    hs = hs[:, :, :H]
    return hs, (hs[-1], c_fin[:, :H])


# ---------------------------------------------------------------------------
# Pure-JAX references
# ---------------------------------------------------------------------------
def _ref_cell_f32(x, hx, cx, w_ih, w_hh, b_ih, b_hh, noise_in, noise_hidden):
    xi = x if noise_in is None else x * noise_in
    hh = hx if noise_hidden is None else hx * noise_hidden
    gates = xi @ w_ih.T + b_ih + hh @ w_hh.T + b_hh
    H = hx.shape[-1]
    i = jax.nn.sigmoid(gates[:, :H])
    f = jax.nn.sigmoid(gates[:, H:2 * H])
    g = jnp.tanh(gates[:, 2 * H:3 * H])
    o = jax.nn.sigmoid(gates[:, 3 * H:])
    cy = f * cx + i * g
    hy = o * jnp.tanh(cy)
    return hy, cy


def _ref_cell_bf16(x, hx, cx, w_ih, w_hh, b_ih, b_hh, noise_in, noise_hidden):
    # mirrors the kernel numerics: bf16 matmul inputs, f32 accumulation/state
    xi = (x if noise_in is None else x * noise_in).astype(jnp.bfloat16)
    hh = (hx if noise_hidden is None else hx * noise_hidden).astype(jnp.bfloat16)
    gates = (jnp.dot(xi, w_ih.T.astype(jnp.bfloat16),
                     preferred_element_type=jnp.float32)
             + jnp.dot(hh, w_hh.T.astype(jnp.bfloat16),
                       preferred_element_type=jnp.float32)
             + b_ih + b_hh)
    H = hx.shape[-1]
    i = _sigmoid(gates[:, :H])
    f = _sigmoid(gates[:, H:2 * H])
    g = jnp.tanh(gates[:, 2 * H:3 * H])
    o = _sigmoid(gates[:, 3 * H:])
    cy = f * cx + i * g
    hy = o * jnp.tanh(cy)
    return hy, cy


def _ref_sequence(cell_fn, xs, h0, c0, w_ih, w_hh, b_ih, b_hh,
                  noise_in, noise_hidden):
    h, c = h0, c0
    hs = []
    for t in range(xs.shape[0]):
        h, c = cell_fn(xs[t], h, c, w_ih, w_hh, b_ih, b_hh,
                       noise_in, noise_hidden)
        hs.append(h)
    return jnp.stack(hs, axis=0), (h, c)


if __name__ == "__main__":
    B, IN, H, T = 8, 32, 32, 8
    p_in, p_hidden = 0.5, 0.5

    key = jax.random.PRNGKey(0)
    k_x, k_xs, k_h, k_c, k_wih, k_whh, k_nin, k_nh = jax.random.split(key, 8)

    # reset_parameters(): 2-D weights ~ U(-stdv, stdv), 1-D biases = 0
    stdv = 1.0 / math.sqrt(H)
    w_ih = jax.random.uniform(k_wih, (4 * H, IN), jnp.float32, -stdv, stdv)
    w_hh = jax.random.uniform(k_whh, (4 * H, H), jnp.float32, -stdv, stdv)
    b_ih = jnp.zeros((4 * H,), jnp.float32)
    b_hh = jnp.zeros((4 * H,), jnp.float32)

    x = jax.random.normal(k_x, (B, IN), jnp.float32)
    xs = jax.random.normal(k_xs, (T, B, IN), jnp.float32)
    hx = jax.random.normal(k_h, (B, H), jnp.float32)
    cx = jax.random.normal(k_c, (B, H), jnp.float32)

    # training-mode variational dropout masks (reset_noise)
    noise_in = (jax.random.bernoulli(k_nin, 1.0 - p_in, (B, IN))
                .astype(jnp.float32) / (1.0 - p_in))
    noise_hidden = (jax.random.bernoulli(k_nh, 1.0 - p_hidden, (B, H))
                    .astype(jnp.float32) / (1.0 - p_hidden))

    prepared = prepare_lstm_weights(w_ih, w_hh, b_ih, b_hh)  # once per layer

    # ---- single cell, training mode (with noise) ----
    hy, cy = var_fast_lstm_cell(x, hx, cx, prepared, noise_in, noise_hidden)
    jax.block_until_ready((hy, cy))
    hy_bf, cy_bf = _ref_cell_bf16(x, hx, cx, w_ih, w_hh, b_ih, b_hh,
                                  noise_in, noise_hidden)
    hy_f, cy_f = _ref_cell_f32(x, hx, cx, w_ih, w_hh, b_ih, b_hh,
                               noise_in, noise_hidden)
    assert jnp.allclose(hy, hy_bf, atol=2e-3, rtol=2e-3)
    assert jnp.allclose(cy, cy_bf, atol=2e-3, rtol=2e-3)
    assert jnp.allclose(hy, hy_f, atol=5e-2, rtol=5e-2)
    assert jnp.allclose(cy, cy_f, atol=5e-2, rtol=5e-2)

    # ---- single cell, eval mode (no masks -> no mask DMAs / multiplies) ----
    hy2, cy2 = var_fast_lstm_cell(x, hx, cx, prepared)
    jax.block_until_ready((hy2, cy2))
    hy2_bf, cy2_bf = _ref_cell_bf16(x, hx, cx, w_ih, w_hh, b_ih, b_hh, None, None)
    hy2_f, cy2_f = _ref_cell_f32(x, hx, cx, w_ih, w_hh, b_ih, b_hh, None, None)
    assert jnp.allclose(hy2, hy2_bf, atol=2e-3, rtol=2e-3)
    assert jnp.allclose(cy2, cy2_bf, atol=2e-3, rtol=2e-3)
    assert jnp.allclose(hy2, hy2_f, atol=5e-2, rtol=5e-2)
    assert jnp.allclose(cy2, cy2_f, atol=5e-2, rtol=5e-2)

    # ---- fused sequence kernel (weights VMEM-resident, h/c in scratch) ----
    hs, (hT, cT) = var_fast_lstm_sequence(xs, hx, cx, prepared,
                                          noise_in, noise_hidden)
    jax.block_until_ready((hs, hT, cT))
    hs_bf, (hT_bf, cT_bf) = _ref_sequence(_ref_cell_bf16, xs, hx, cx,
                                          w_ih, w_hh, b_ih, b_hh,
                                          noise_in, noise_hidden)
    hs_f, (hT_f, cT_f) = _ref_sequence(_ref_cell_f32, xs, hx, cx,
                                       w_ih, w_hh, b_ih, b_hh,
                                       noise_in, noise_hidden)
    assert jnp.allclose(hs, hs_bf, atol=5e-3, rtol=5e-3)
    assert jnp.allclose(hT, hT_bf, atol=5e-3, rtol=5e-3)
    assert jnp.allclose(cT, cT_bf, atol=5e-3, rtol=5e-3)
    assert jnp.allclose(hs, hs_f, atol=7e-2, rtol=7e-2)
    assert jnp.allclose(cT, cT_f, atol=7e-2, rtol=7e-2)

    print("KERNEL_OK")
</pallas_src>

<mosaic_0001>
module attributes {stable_mosaic.version = 11 : i64} {
  func.func @_lstm_cell_kernel(%arg0: i32, %arg1: memref<8x128xf32, #tpu.memory_space<vmem>>, %arg2: memref<8x128xf32, #tpu.memory_space<vmem>>, %arg3: memref<8x128xf32, #tpu.memory_space<vmem>>, %arg4: memref<8x128xf32, #tpu.memory_space<vmem>>, %arg5: memref<8x128xf32, #tpu.memory_space<vmem>>, %arg6: memref<256x512xbf16, #tpu.memory_space<vmem>>, %arg7: memref<1x512xf32, #tpu.memory_space<vmem>>, %arg8: memref<8x128xf32, #tpu.memory_space<vmem>>, %arg9: memref<8x128xf32, #tpu.memory_space<vmem>>, %arg10: memref<8x256xbf16, #tpu.memory_space<vmem>>) attributes {dimension_semantics = [#tpu.dimension_semantics<parallel>], iteration_bounds = array<i64: 1>, scalar_prefetch = 0 : i64, scratch_operands = 1 : i64, tpu.core_type = #tpu.core_type<tc>, window_params = [{transform_indices = @transform_0, window_bounds = array<i64: 8, 128>}, {transform_indices = @transform_1, window_bounds = array<i64: 8, 128>}, {transform_indices = @transform_2, window_bounds = array<i64: 8, 128>}, {transform_indices = @transform_3, window_bounds = array<i64: 8, 128>}, {transform_indices = @transform_4, window_bounds = array<i64: 8, 128>}, {pipeline_mode = #tpu.pipeline_mode<synchronous>, transform_indices = @transform_5, window_bounds = array<i64: 256, 512>}, {pipeline_mode = #tpu.pipeline_mode<synchronous>, transform_indices = @transform_6, window_bounds = array<i64: 1, 512>}, {transform_indices = @transform_7, window_bounds = array<i64: 8, 128>}, {transform_indices = @transform_8, window_bounds = array<i64: 8, 128>}]} {
    %c0 = arith.constant 0 : index
    %c0_0 = arith.constant 0 : index
    %0 = vector.load %arg1[%c0, %c0_0] : memref<8x128xf32, #tpu.memory_space<vmem>>, vector<8x128xf32>
    %c0_1 = arith.constant 0 : index
    %c0_2 = arith.constant 0 : index
    %1 = vector.load %arg4[%c0_1, %c0_2] : memref<8x128xf32, #tpu.memory_space<vmem>>, vector<8x128xf32>
    %2 = arith.mulf %0, %1 : vector<8x128xf32>
    %c0_3 = arith.constant 0 : index
    %c0_4 = arith.constant 0 : index
    %3 = vector.load %arg2[%c0_3, %c0_4] : memref<8x128xf32, #tpu.memory_space<vmem>>, vector<8x128xf32>
    %c0_5 = arith.constant 0 : index
    %c0_6 = arith.constant 0 : index
    %4 = vector.load %arg5[%c0_5, %c0_6] : memref<8x128xf32, #tpu.memory_space<vmem>>, vector<8x128xf32>
    %5 = arith.mulf %3, %4 : vector<8x128xf32>
    %6 = arith.truncf %2 : vector<8x128xf32> to vector<8x128xbf16>
    %c0_7 = arith.constant 0 : index
    %c0_8 = arith.constant 0 : index
    %7 = vector.load %arg10[%c0_7, %c0_8] : memref<8x256xbf16, #tpu.memory_space<vmem>>, vector<8x128xbf16>
    tpu.vector_store %arg10[%c0_7, %c0_8], %6 {strides = array<i32>} : memref<8x256xbf16, #tpu.memory_space<vmem>>, vector<8x128xbf16>,
    %8 = arith.truncf %5 : vector<8x128xf32> to vector<8x128xbf16>
    %c0_9 = arith.constant 0 : index
    %c128 = arith.constant 128 : index
    %9 = vector.load %arg10[%c0_9, %c128] : memref<8x256xbf16, #tpu.memory_space<vmem>>, vector<8x128xbf16>
    tpu.vector_store %arg10[%c0_9, %c128], %8 {strides = array<i32>} : memref<8x256xbf16, #tpu.memory_space<vmem>>, vector<8x128xbf16>,
    %c0_10 = arith.constant 0 : index
    %c0_11 = arith.constant 0 : index
    %10 = vector.load %arg10[%c0_10, %c0_11] : memref<8x256xbf16, #tpu.memory_space<vmem>>, vector<8x256xbf16>
    %c0_12 = arith.constant 0 : index
    %c0_13 = arith.constant 0 : index
    %11 = vector.load %arg6[%c0_12, %c0_13] : memref<256x512xbf16, #tpu.memory_space<vmem>>, vector<256x512xbf16>
    %cst = arith.constant dense<0.000000e+00> : vector<8x512xf32>
    %12 = tpu.matmul %10, %11, %cst {dimension_numbers = #tpu.dot_dimension_numbers<[1], [0], [0], [1], [0, 0, 1, 1], [], []>} : vector<8x256xbf16>, vector<256x512xbf16>, vector<8x512xf32> -> vector<8x512xf32>
    %c0_14 = arith.constant 0 : index
    %c0_15 = arith.constant 0 : index
    %13 = vector.load %arg7[%c0_14, %c0_15] : memref<1x512xf32, #tpu.memory_space<vmem>>, vector<1x512xf32>
    %14 = vector.broadcast %13 : vector<1x512xf32> to vector<8x512xf32>
    %15 = arith.addf %12, %14 : vector<8x512xf32>
    %16 = vector.extract_strided_slice %15 {offsets = [0, 0], sizes = [8, 128], strides = [1, 1]} : vector<8x512xf32> to vector<8x128xf32>
    %cst_16 = arith.constant 5.000000e-01 : f32
    %17 = vector.broadcast %cst_16 : f32 to vector<8x128xf32>
    %18 = arith.mulf %17, %16 : vector<8x128xf32>
    %19 = math.tanh %18 : vector<8x128xf32>
    %cst_17 = arith.constant 5.000000e-01 : f32
    %20 = vector.broadcast %cst_17 : f32 to vector<8x128xf32>
    %21 = arith.mulf %20, %19 : vector<8x128xf32>
    %cst_18 = arith.constant 5.000000e-01 : f32
    %22 = vector.broadcast %cst_18 : f32 to vector<8x128xf32>
    %23 = arith.addf %21, %22 : vector<8x128xf32>
    %24 = vector.extract_strided_slice %15 {offsets = [0, 128], sizes = [8, 128], strides = [1, 1]} : vector<8x512xf32> to vector<8x128xf32>
    %cst_19 = arith.constant 5.000000e-01 : f32
    %25 = vector.broadcast %cst_19 : f32 to vector<8x128xf32>
    %26 = arith.mulf %25, %24 : vector<8x128xf32>
    %27 = math.tanh %26 : vector<8x128xf32>
    %cst_20 = arith.constant 5.000000e-01 : f32
    %28 = vector.broadcast %cst_20 : f32 to vector<8x128xf32>
    %29 = arith.mulf %28, %27 : vector<8x128xf32>
    %cst_21 = arith.constant 5.000000e-01 : f32
    %30 = vector.broadcast %cst_21 : f32 to vector<8x128xf32>
    %31 = arith.addf %29, %30 : vector<8x128xf32>
    %32 = vector.extract_strided_slice %15 {offsets = [0, 256], sizes = [8, 128], strides = [1, 1]} : vector<8x512xf32> to vector<8x128xf32>
    %33 = math.tanh %32 : vector<8x128xf32>
    %34 = vector.extract_strided_slice %15 {offsets = [0, 384], sizes = [8, 128], strides = [1, 1]} : vector<8x512xf32> to vector<8x128xf32>
    %cst_22 = arith.constant 5.000000e-01 : f32
    %35 = vector.broadcast %cst_22 : f32 to vector<8x128xf32>
    %36 = arith.mulf %35, %34 : vector<8x128xf32>
    %37 = math.tanh %36 : vector<8x128xf32>
    %cst_23 = arith.constant 5.000000e-01 : f32
    %38 = vector.broadcast %cst_23 : f32 to vector<8x128xf32>
    %39 = arith.mulf %38, %37 : vector<8x128xf32>
    %cst_24 = arith.constant 5.000000e-01 : f32
    %40 = vector.broadcast %cst_24 : f32 to vector<8x128xf32>
    %41 = arith.addf %39, %40 : vector<8x128xf32>
    %c0_25 = arith.constant 0 : index
    %c0_26 = arith.constant 0 : index
    %42 = vector.load %arg3[%c0_25, %c0_26] : memref<8x128xf32, #tpu.memory_space<vmem>>, vector<8x128xf32>
    %43 = arith.mulf %31, %42 : vector<8x128xf32>
    %44 = arith.mulf %23, %33 : vector<8x128xf32>
    %45 = arith.addf %43, %44 : vector<8x128xf32>
    %46 = math.tanh %45 : vector<8x128xf32>
    %47 = arith.mulf %41, %46 : vector<8x128xf32>
    %c0_27 = arith.constant 0 : index
    %c0_28 = arith.constant 0 : index
    %48 = vector.load %arg9[%c0_27, %c0_28] : memref<8x128xf32, #tpu.memory_space<vmem>>, vector<8x128xf32>
    tpu.vector_store %arg9[%c0_27, %c0_28], %45 {strides = array<i32>} : memref<8x128xf32, #tpu.memory_space<vmem>>, vector<8x128xf32>,
    %c0_29 = arith.constant 0 : index
    %c0_30 = arith.constant 0 : index
    %49 = vector.load %arg8[%c0_29, %c0_30] : memref<8x128xf32, #tpu.memory_space<vmem>>, vector<8x128xf32>
    tpu.vector_store %arg8[%c0_29, %c0_30], %47 {strides = array<i32>} : memref<8x128xf32, #tpu.memory_space<vmem>>, vector<8x128xf32>,
    return
  }
  func.func @transform_0(%arg0: i32) -> (i32, i32) {
    %c0_i32 = arith.constant 0 : i32
    %c0_i32_0 = arith.constant 0 : i32
    return %arg0, %c0_i32 : i32, i32
  }
  func.func @transform_1(%arg0: i32) -> (i32, i32) {
    %c0_i32 = arith.constant 0 : i32
    %c0_i32_0 = arith.constant 0 : i32
    return %arg0, %c0_i32 : i32, i32
  }
  func.func @transform_2(%arg0: i32) -> (i32, i32) {
    %c0_i32 = arith.constant 0 : i32
    %c0_i32_0 = arith.constant 0 : i32
    return %arg0, %c0_i32 : i32, i32
  }
  func.func @transform_3(%arg0: i32) -> (i32, i32) {
    %c0_i32 = arith.constant 0 : i32
    %c0_i32_0 = arith.constant 0 : i32
    return %arg0, %c0_i32 : i32, i32
  }
  func.func @transform_4(%arg0: i32) -> (i32, i32) {
    %c0_i32 = arith.constant 0 : i32
    %c0_i32_0 = arith.constant 0 : i32
    return %arg0, %c0_i32 : i32, i32
  }
  func.func @transform_5(%arg0: i32) -> (i32, i32) {
    %c0_i32 = arith.constant 0 : i32
    %c0_i32_0 = arith.constant 0 : i32
    %c0_i32_1 = arith.constant 0 : i32
    return %c0_i32, %c0_i32_0 : i32, i32
  }
  func.func @transform_6(%arg0: i32) -> (i32, i32) {
    %c0_i32 = arith.constant 0 : i32
    %c0_i32_0 = arith.constant 0 : i32
    %c0_i32_1 = arith.constant 0 : i32
    return %c0_i32, %c0_i32_0 : i32, i32
  }
  func.func @transform_7(%arg0: i32) -> (i32, i32) {
    %c0_i32 = arith.constant 0 : i32
    %c0_i32_0 = arith.constant 0 : i32
    return %arg0, %c0_i32 : i32, i32
  }
  func.func @transform_8(%arg0: i32) -> (i32, i32) {
    %c0_i32 = arith.constant 0 : i32
    %c0_i32_0 = arith.constant 0 : i32
    return %arg0, %c0_i32 : i32, i32
  }
}

</mosaic_0001>

<llo_original>
// kernel: tpu_custom_call.1
$region0: #{tpu_custom_call.1}
  #allocation0 [shape = 'u32[]', space=smem, size = 0x4, offset = 0x4, fixed_abs, tag = 'smem constant byte address 0x4 - core index']
  #allocation1 [shape = 'u32[144,128]{1,0:T(1,128)}', space=vmem, size = 0x12000, scoped, tag = 'internal scratch']
  #allocation2 [shape = 'bf16[8,256]{1,0:T(8,128)(2,1)}', space=vmem, size = 0x1000, scoped, tag = 'scratch operand']
  %s0 = inlined_call_operand.hbm [shape: f32[8,128], index: 0, kind: input, shape index: {}]
  %s1 = inlined_call_operand.hbm [shape: f32[8,128], index: 1, kind: input, shape index: {}]
  %s2 = inlined_call_operand.hbm [shape: f32[8,128], index: 2, kind: input, shape index: {}]
  %s3 = inlined_call_operand.vmem [shape: f32[8,128], index: 3, kind: input, shape index: {}]
  %s4 = inlined_call_operand.hbm [shape: f32[8,128], index: 4, kind: input, shape index: {}]
  %s5 = inlined_call_operand.hbm [shape: bf16[256,512], index: 5, kind: input, shape index: {}]
  %s6 = inlined_call_operand.vmem [shape: f32[1,512], index: 6, kind: input, shape index: {}]
  %s7 = inlined_call_operand.hbm [shape: f32[8,128], index: 7, kind: output, shape index: {0}]
  %s8 = inlined_call_operand.hbm [shape: f32[8,128], index: 8, kind: output, shape index: {1}]
  %9 = xla_tuple %s7, %s8
  %s10 = sld [smem:[#allocation0]]
  $region66: #{tpu_custom_call.1} parent=0
    _
  %s12 = ssub.s32 1, %s10
  %s13 = scalar_select 0, %s12, %s10
  $region1: #{tpu_custom_call.1} parent=0
    #allocation3 [shape = 'u8[4096]{0}', space=vmem, size = 0x1000, scoped, tag = 'input window, operand 0, single buffered']
    #allocation4 [shape = 's32[1]{0}', space=sflag, size = 0x4, scoped, tag = 'scoped memory for tpu_custom_call.1']
    #allocation5 [shape = 's32[1]{0}', space=sflag, size = 0x4, scoped, tag = 'scoped memory for tpu_custom_call.1']
    #allocation6 [shape = 'u8[4096]{0}', space=vmem, size = 0x1000, scoped, tag = 'input window, operand 1, single buffered']
    #allocation7 [shape = 's32[1]{0}', space=sflag, size = 0x4, scoped, tag = 'scoped memory for tpu_custom_call.1']
    #allocation8 [shape = 'u8[4096]{0}', space=vmem, size = 0x1000, scoped, tag = 'input window, operand 2, single buffered']
    #allocation9 [shape = 'u8[4096]{0}', space=vmem, size = 0x1000, scoped, tag = 'input window, operand 4, single buffered']
    #allocation10 [shape = 's32[1]{0}', space=sflag, size = 0x4, scoped, tag = 'scoped memory for tpu_custom_call.1']
    #allocation11 [shape = 'u8[262144]{0}', space=vmem, size = 0x40000, scoped, tag = 'input window, operand 5, single buffered']
    #allocation12 [shape = 'u8[4096]{0}', space=vmem, size = 0x1000, scoped, tag = 'output window, operand 0, single buffered']
    #allocation13 [shape = 'u8[4096]{0}', space=vmem, size = 0x1000, scoped, tag = 'output window, operand 1, single buffered']
    #allocation14 [shape = 's32[1]{0}', space=sflag, size = 0x4, scoped, tag = 'scoped memory for tpu_custom_call.1']
    %14 = vsyncpa [#allocation4], 0
    %15 = vsyncpa [#allocation7], 0
    %16 = vsyncpa [#allocation10], 0
    %17 = vsyncpa [#allocation5], 0
    %18 = vsyncpa [#allocation14], 0
    // Predicated region
    $region2: #{tpu_custom_call.1} parent=1 // pred_check
      _
    $region3: #{tpu_custom_call.1} parent=1 // pred_check_branch
      %20 = sbr.rel (0) target = $region5
    $region4: #{tpu_custom_call.1} parent=1 // pred_region
      %s22 = ssub.s32 128, 128
      %23 = vsyncadd [#allocation4], %s22
      %s25 = sshll.u32 [#allocation3], 4
      %s26 = int_to_ptr.vmem [resolvable:$true] %s25
      %28 = dma.hbm_to_vmem [thread:$0]  %s0, 128, %s26, [#allocation4]
    $region5: #{tpu_custom_call.1} parent=1 // pred_fallthru
      _
    // Predicated region
    $region6: #{tpu_custom_call.1} parent=1 // pred_check
      _
    $region7: #{tpu_custom_call.1} parent=1 // pred_check_branch
      %30 = sbr.rel (0) target = $region9
    $region8: #{tpu_custom_call.1} parent=1 // pred_region
      %s32 = ssub.s32 128, 128
      %33 = vsyncadd [#allocation7], %s32
      %s35 = sshll.u32 [#allocation6], 4
      %s36 = int_to_ptr.vmem [resolvable:$true] %s35
      %38 = dma.hbm_to_vmem [thread:$0]  %s1, 128, %s36, [#allocation7]
    $region9: #{tpu_custom_call.1} parent=1 // pred_fallthru
      _
    // Predicated region
    $region10: #{tpu_custom_call.1} parent=1 // pred_check
      _
    $region11: #{tpu_custom_call.1} parent=1 // pred_check_branch
      %40 = sbr.rel (0) target = $region13
    $region12: #{tpu_custom_call.1} parent=1 // pred_region
      %s42 = ssub.s32 128, 128
      %43 = vsyncadd [#allocation7], %s42
      %s45 = sshll.u32 [#allocation8], 4
      %s46 = int_to_ptr.vmem [resolvable:$true] %s45
      %48 = dma.hbm_to_vmem [thread:$0]  %s2, 128, %s46, [#allocation7]
    $region13: #{tpu_custom_call.1} parent=1 // pred_fallthru
      _
    // Predicated region
    $region14: #{tpu_custom_call.1} parent=1 // pred_check
      _
    $region15: #{tpu_custom_call.1} parent=1 // pred_check_branch
      %50 = sbr.rel (0) target = $region17
    $region16: #{tpu_custom_call.1} parent=1 // pred_region
      _
    $region17: #{tpu_custom_call.1} parent=1 // pred_fallthru
      _
    // Predicated region
    $region18: #{tpu_custom_call.1} parent=1 // pred_check
      _
    $region19: #{tpu_custom_call.1} parent=1 // pred_check_branch
      %52 = sbr.rel (0) target = $region21
    $region20: #{tpu_custom_call.1} parent=1 // pred_region
      %s54 = ssub.s32 128, 128
      %55 = vsyncadd [#allocation10], %s54
      %s57 = sshll.u32 [#allocation9], 4
      %s58 = int_to_ptr.vmem [resolvable:$true] %s57
      %60 = dma.hbm_to_vmem [thread:$0]  %s4, 128, %s58, [#allocation10]
    $region21: #{tpu_custom_call.1} parent=1 // pred_fallthru
      _
    // Predicated region
    $region22: #{tpu_custom_call.1} parent=1 // pred_check
      _
    $region23: #{tpu_custom_call.1} parent=1 // pred_check_branch
      %62 = sbr.rel (0) target = $region25
    $region24: #{tpu_custom_call.1} parent=1 // pred_region
      %s64 = ssub.s32 8192, 8192
      %65 = vsyncadd [#allocation10], %s64
      %s66 = sshll.u32 [#allocation11], 4
      %s67 = int_to_ptr.vmem [resolvable:$true] %s66
      %72 = dma.hbm_to_vmem [thread:$0]  %s5, 8192, %s67, [#allocation10], 256, 256, 16
    $region25: #{tpu_custom_call.1} parent=1 // pred_fallthru
      _
    // Predicated region
    $region26: #{tpu_custom_call.1} parent=1 // pred_check
      _
    $region27: #{tpu_custom_call.1} parent=1 // pred_check_branch
      %74 = sbr.rel (0) target = $region29
    $region28: #{tpu_custom_call.1} parent=1 // pred_region
      _
    $region29: #{tpu_custom_call.1} parent=1 // pred_fallthru
      _
    // Predicated region
    $region30: #{tpu_custom_call.1} parent=1 // pred_check
      _
    $region31: #{tpu_custom_call.1} parent=1 // pred_check_branch
      %76 = sbr.rel (0) target = $region33
    $region32: #{tpu_custom_call.1} parent=1 // pred_region
      %77 = dma.done [#allocation4], 128
    $region33: #{tpu_custom_call.1} parent=1 // pred_fallthru
      _
    // Predicated region
    $region34: #{tpu_custom_call.1} parent=1 // pred_check
      _
    $region35: #{tpu_custom_call.1} parent=1 // pred_check_branch
      %79 = sbr.rel (0) target = $region37
    $region36: #{tpu_custom_call.1} parent=1 // pred_region
      %80 = dma.done [#allocation7], 128
    $region37: #{tpu_custom_call.1} parent=1 // pred_fallthru
      _
    // Predicated region
    $region38: #{tpu_custom_call.1} parent=1 // pred_check
      _
    $region39: #{tpu_custom_call.1} parent=1 // pred_check_branch
      %82 = sbr.rel (0) target = $region41
    $region40: #{tpu_custom_call.1} parent=1 // pred_region
      %83 = dma.done [#allocation7], 128
    $region41: #{tpu_custom_call.1} parent=1 // pred_fallthru
      _
    // Predicated region
    $region42: #{tpu_custom_call.1} parent=1 // pred_check
      _
    $region43: #{tpu_custom_call.1} parent=1 // pred_check_branch
      %85 = sbr.rel (0) target = $region45
    $region44: #{tpu_custom_call.1} parent=1 // pred_region
      %86 = dma.done [#allocation10], 128
    $region45: #{tpu_custom_call.1} parent=1 // pred_fallthru
      _
    // Predicated region
    $region46: #{tpu_custom_call.1} parent=1 // pred_check
      _
    $region47: #{tpu_custom_call.1} parent=1 // pred_check_branch
      %88 = sbr.rel (0) target = $region49
    $region48: #{tpu_custom_call.1} parent=1 // pred_region
      %89 = dma.done [#allocation10], 8192
    $region49: #{tpu_custom_call.1} parent=1 // pred_fallthru
      _
    %v90 = vld [vmem:[#allocation3] sm:$0xff]
    %v91 = vld [vmem:[%s3] sm:$0xff]
    %v92 = vmul.f32 %v90, %v91
    %v93 = vld [vmem:[#allocation6] sm:$0xff]
    %v94 = vld [vmem:[#allocation9] sm:$0xff]
    %v95 = vmul.f32 %v93, %v94
    %v96 = vpack.c.bf16 %v92, %v92
    %97 = vst [vmem:[#allocation2] sm:$0xf] %v96
    %v98 = vpack.c.bf16 %v95, %v95
    %99 = vst [vmem:[#allocation2 + $0x4] sm:$0xf] %v98
    %v100 = vld [vmem:[#allocation2] sm:$0xff]
    %v101 = vld [vmem:[#allocation11] sm:$0xff]
    %v102 = vld [vmem:[#allocation11 + $0x8] sm:$0xff]
    %v103 = vld [vmem:[#allocation11 + $0x10] sm:$0xff]
    %v104 = vld [vmem:[#allocation11 + $0x18] sm:$0xff]
    %v105 = vld [vmem:[#allocation11 + $0x20] sm:$0xff]
    %v106 = vld [vmem:[#allocation11 + $0x28] sm:$0xff]
    %v107 = vld [vmem:[#allocation11 + $0x30] sm:$0xff]
    %v108 = vld [vmem:[#allocation11 + $0x38] sm:$0xff]
    %v109 = vld [vmem:[#allocation11 + $0x40] sm:$0xff]
    %v110 = vld [vmem:[#allocation11 + $0x48] sm:$0xff]
    %v111 = vld [vmem:[#allocation11 + $0x50] sm:$0xff]
    %v112 = vld [vmem:[#allocation11 + $0x58] sm:$0xff]
    %v113 = vld [vmem:[#allocation11 + $0x60] sm:$0xff]
    %v114 = vld [vmem:[#allocation11 + $0x68] sm:$0xff]
    %v115 = vld [vmem:[#allocation11 + $0x70] sm:$0xff]
    %v116 = vld [vmem:[#allocation11 + $0x78] sm:$0xff]
    %v117 = vld [vmem:[#allocation11 + $0x80] sm:$0xff]
    %v118 = vld [vmem:[#allocation11 + $0x88] sm:$0xff]
    %v119 = vld [vmem:[#allocation11 + $0x90] sm:$0xff]
    %v120 = vld [vmem:[#allocation11 + $0x98] sm:$0xff]
    %v121 = vld [vmem:[#allocation11 + $0xa0] sm:$0xff]
    %v122 = vld [vmem:[#allocation11 + $0xa8] sm:$0xff]
    %v123 = vld [vmem:[#allocation11 + $0xb0] sm:$0xff]
    %v124 = vld [vmem:[#allocation11 + $0xb8] sm:$0xff]
    %v125 = vld [vmem:[#allocation11 + $0xc0] sm:$0xff]
    %v126 = vld [vmem:[#allocation11 + $0xc8] sm:$0xff]
    %v127 = vld [vmem:[#allocation11 + $0xd0] sm:$0xff]
    %v128 = vld [vmem:[#allocation11 + $0xd8] sm:$0xff]
    %v129 = vld [vmem:[#allocation11 + $0xe0] sm:$0xff]
    %v130 = vld [vmem:[#allocation11 + $0xe8] sm:$0xff]
    %v131 = vld [vmem:[#allocation11 + $0xf0] sm:$0xff]
    %v132 = vld [vmem:[#allocation11 + $0xf8] sm:$0xff]
    %v133 = vld [vmem:[#allocation11 + $0x100] sm:$0xff]
    %v134 = vld [vmem:[#allocation11 + $0x108] sm:$0xff]
    %v135 = vld [vmem:[#allocation11 + $0x110] sm:$0xff]
    %v136 = vld [vmem:[#allocation11 + $0x118] sm:$0xff]
    %v137 = vld [vmem:[#allocation11 + $0x120] sm:$0xff]
    %v138 = vld [vmem:[#allocation11 + $0x128] sm:$0xff]
    %v139 = vld [vmem:[#allocation11 + $0x130] sm:$0xff]
    %v140 = vld [vmem:[#allocation11 + $0x138] sm:$0xff]
    %v141 = vld [vmem:[#allocation11 + $0x140] sm:$0xff]
    %v142 = vld [vmem:[#allocation11 + $0x148] sm:$0xff]
    %v143 = vld [vmem:[#allocation11 + $0x150] sm:$0xff]
    %v144 = vld [vmem:[#allocation11 + $0x158] sm:$0xff]
    %v145 = vld [vmem:[#allocation11 + $0x160] sm:$0xff]
    %v146 = vld [vmem:[#allocation11 + $0x168] sm:$0xff]
    %v147 = vld [vmem:[#allocation11 + $0x170] sm:$0xff]
    %v148 = vld [vmem:[#allocation11 + $0x178] sm:$0xff]
    %v149 = vld [vmem:[#allocation11 + $0x180] sm:$0xff]
    %v150 = vld [vmem:[#allocation11 + $0x188] sm:$0xff]
    %v151 = vld [vmem:[#allocation11 + $0x190] sm:$0xff]
    %v152 = vld [vmem:[#allocation11 + $0x198] sm:$0xff]
    %v153 = vld [vmem:[#allocation11 + $0x1a0] sm:$0xff]
    %v154 = vld [vmem:[#allocation11 + $0x1a8] sm:$0xff]
    %v155 = vld [vmem:[#allocation11 + $0x1b0] sm:$0xff]
    %v156 = vld [vmem:[#allocation11 + $0x1b8] sm:$0xff]
    %v157 = vld [vmem:[#allocation11 + $0x1c0] sm:$0xff]
    %v158 = vld [vmem:[#allocation11 + $0x1c8] sm:$0xff]
    %v159 = vld [vmem:[#allocation11 + $0x1d0] sm:$0xff]
    %v160 = vld [vmem:[#allocation11 + $0x1d8] sm:$0xff]
    %v161 = vld [vmem:[#allocation11 + $0x1e0] sm:$0xff]
    %v162 = vld [vmem:[#allocation11 + $0x1e8] sm:$0xff]
    %v163 = vld [vmem:[#allocation11 + $0x1f0] sm:$0xff]
    %v164 = vld [vmem:[#allocation11 + $0x1f8] sm:$0xff]
    %v165 = vld [vmem:[%s6] sm:$0xf]
    %v167 = vlaneseq
    %v168 = vshrl.u32 %v167, 7
    %v169 = vsub.s32 0, %v168
    %v170 = vrot.slane %v165, %v169
    %v171 = vlaneseq
    %v172 = vshrl.u32 %v171, 7
    %v173 = vsub.s32 1, %v172
    %v174 = vrot.slane %v165, %v173
    %v175 = vlaneseq
    %v176 = vshrl.u32 %v175, 7
    %v177 = vsub.s32 2, %v176
    %v178 = vrot.slane %v165, %v177
    %v179 = vlaneseq
    %v180 = vshrl.u32 %v179, 7
    %v181 = vsub.s32 3, %v180
    %v182 = vrot.slane %v165, %v181
    %v188 = vunpack.c.l.b16 %v100
    %v189 = vunpack.c.h.b16 %v100
    %v190 = vpack.c.b16 %v188, %v188
    %v191 = vpack.c.b16 %v189, %v189
    %v258 = vunpack.c.l.b16 %v101
    %v259 = vunpack.c.h.b16 %v101
    %v260 = vunpack.c.l.b16 %v102
    %v261 = vunpack.c.h.b16 %v102
    %v262 = vunpack.c.l.b16 %v103
    %v263 = vunpack.c.h.b16 %v103
    %v264 = vunpack.c.l.b16 %v104
    %v265 = vunpack.c.h.b16 %v104
    %v266 = vunpack.c.l.b16 %v105
    %v267 = vunpack.c.h.b16 %v105
    %v268 = vunpack.c.l.b16 %v106
    %v269 = vunpack.c.h.b16 %v106
    %v270 = vunpack.c.l.b16 %v107
    %v271 = vunpack.c.h.b16 %v107
    %v272 = vunpack.c.l.b16 %v108
    %v273 = vunpack.c.h.b16 %v108
    %v274 = vunpack.c.l.b16 %v109
    %v275 = vunpack.c.h.b16 %v109
    %v276 = vunpack.c.l.b16 %v110
    %v277 = vunpack.c.h.b16 %v110
    %v278 = vunpack.c.l.b16 %v111
    %v279 = vunpack.c.h.b16 %v111
    %v280 = vunpack.c.l.b16 %v112
    %v281 = vunpack.c.h.b16 %v112
    %v282 = vunpack.c.l.b16 %v113
    %v283 = vunpack.c.h.b16 %v113
    %v284 = vunpack.c.l.b16 %v114
    %v285 = vunpack.c.h.b16 %v114
    %v286 = vunpack.c.l.b16 %v115
    %v287 = vunpack.c.h.b16 %v115
    %v288 = vunpack.c.l.b16 %v116
    %v289 = vunpack.c.h.b16 %v116
    %v290 = vunpack.c.l.b16 %v117
    %v291 = vunpack.c.h.b16 %v117
    %v292 = vunpack.c.l.b16 %v118
    %v293 = vunpack.c.h.b16 %v118
    %v294 = vunpack.c.l.b16 %v119
    %v295 = vunpack.c.h.b16 %v119
    %v296 = vunpack.c.l.b16 %v120
    %v297 = vunpack.c.h.b16 %v120
    %v298 = vunpack.c.l.b16 %v121
    %v299 = vunpack.c.h.b16 %v121
    %v300 = vunpack.c.l.b16 %v122
    %v301 = vunpack.c.h.b16 %v122
    %v302 = vunpack.c.l.b16 %v123
    %v303 = vunpack.c.h.b16 %v123
    %v304 = vunpack.c.l.b16 %v124
    %v305 = vunpack.c.h.b16 %v124
    %v306 = vunpack.c.l.b16 %v125
    %v307 = vunpack.c.h.b16 %v125
    %v308 = vunpack.c.l.b16 %v126
    %v309 = vunpack.c.h.b16 %v126
    %v310 = vunpack.c.l.b16 %v127
    %v311 = vunpack.c.h.b16 %v127
    %v312 = vunpack.c.l.b16 %v128
    %v313 = vunpack.c.h.b16 %v128
    %v314 = vunpack.c.l.b16 %v129
    %v315 = vunpack.c.h.b16 %v129
    %v316 = vunpack.c.l.b16 %v130
    %v317 = vunpack.c.h.b16 %v130
    %v318 = vunpack.c.l.b16 %v131
    %v319 = vunpack.c.h.b16 %v131
    %v320 = vunpack.c.l.b16 %v132
    %v321 = vunpack.c.h.b16 %v132
    %v322 = vunpack.c.l.b16 %v133
    %v323 = vunpack.c.h.b16 %v133
    %v324 = vunpack.c.l.b16 %v134
    %v325 = vunpack.c.h.b16 %v134
    %v326 = vunpack.c.l.b16 %v135
    %v327 = vunpack.c.h.b16 %v135
    %v328 = vunpack.c.l.b16 %v136
    %v329 = vunpack.c.h.b16 %v136
    %v330 = vunpack.c.l.b16 %v137
    %v331 = vunpack.c.h.b16 %v137
    %v332 = vunpack.c.l.b16 %v138
    %v333 = vunpack.c.h.b16 %v138
    %v334 = vunpack.c.l.b16 %v139
    %v335 = vunpack.c.h.b16 %v139
    %v336 = vunpack.c.l.b16 %v140
    %v337 = vunpack.c.h.b16 %v140
    %v338 = vunpack.c.l.b16 %v141
    %v339 = vunpack.c.h.b16 %v141
    %v340 = vunpack.c.l.b16 %v142
    %v341 = vunpack.c.h.b16 %v142
    %v342 = vunpack.c.l.b16 %v143
    %v343 = vunpack.c.h.b16 %v143
    %v344 = vunpack.c.l.b16 %v144
    %v345 = vunpack.c.h.b16 %v144
    %v346 = vunpack.c.l.b16 %v145
    %v347 = vunpack.c.h.b16 %v145
    %v348 = vunpack.c.l.b16 %v146
    %v349 = vunpack.c.h.b16 %v146
    %v350 = vunpack.c.l.b16 %v147
    %v351 = vunpack.c.h.b16 %v147
    %v352 = vunpack.c.l.b16 %v148
    %v353 = vunpack.c.h.b16 %v148
    %v354 = vunpack.c.l.b16 %v149
    %v355 = vunpack.c.h.b16 %v149
    %v356 = vunpack.c.l.b16 %v150
    %v357 = vunpack.c.h.b16 %v150
    %v358 = vunpack.c.l.b16 %v151
    %v359 = vunpack.c.h.b16 %v151
    %v360 = vunpack.c.l.b16 %v152
    %v361 = vunpack.c.h.b16 %v152
    %v362 = vunpack.c.l.b16 %v153
    %v363 = vunpack.c.h.b16 %v153
    %v364 = vunpack.c.l.b16 %v154
    %v365 = vunpack.c.h.b16 %v154
    %v366 = vunpack.c.l.b16 %v155
    %v367 = vunpack.c.h.b16 %v155
    %v368 = vunpack.c.l.b16 %v156
    %v369 = vunpack.c.h.b16 %v156
    %v370 = vunpack.c.l.b16 %v157
    %v371 = vunpack.c.h.b16 %v157
    %v372 = vunpack.c.l.b16 %v158
    %v373 = vunpack.c.h.b16 %v158
    %v374 = vunpack.c.l.b16 %v159
    %v375 = vunpack.c.h.b16 %v159
    %v376 = vunpack.c.l.b16 %v160
    %v377 = vunpack.c.h.b16 %v160
    %v378 = vunpack.c.l.b16 %v161
    %v379 = vunpack.c.h.b16 %v161
    %v380 = vunpack.c.l.b16 %v162
    %v381 = vunpack.c.h.b16 %v162
    %v382 = vunpack.c.l.b16 %v163
    %v383 = vunpack.c.h.b16 %v163
    %v384 = vunpack.c.l.b16 %v164
    %v385 = vunpack.c.h.b16 %v164
    %v386 = vpack.c.b16 %v262, %v258
    %v387 = vpack.c.b16 %v263, %v259
    %v388 = vpack.c.b16 %v264, %v260
    %v389 = vpack.c.b16 %v265, %v261
    %v390 = vpack.c.b16 %v270, %v266
    %v391 = vpack.c.b16 %v271, %v267
    %v392 = vpack.c.b16 %v272, %v268
    %v393 = vpack.c.b16 %v273, %v269
    %v394 = vpack.c.b16 %v278, %v274
    %v395 = vpack.c.b16 %v279, %v275
    %v396 = vpack.c.b16 %v280, %v276
    %v397 = vpack.c.b16 %v281, %v277
    %v398 = vpack.c.b16 %v286, %v282
    %v399 = vpack.c.b16 %v287, %v283
    %v400 = vpack.c.b16 %v288, %v284
    %v401 = vpack.c.b16 %v289, %v285
    %v402 = vpack.c.b16 %v294, %v290
    %v403 = vpack.c.b16 %v295, %v291
    %v404 = vpack.c.b16 %v296, %v292
    %v405 = vpack.c.b16 %v297, %v293
    %v406 = vpack.c.b16 %v302, %v298
    %v407 = vpack.c.b16 %v303, %v299
    %v408 = vpack.c.b16 %v304, %v300
    %v409 = vpack.c.b16 %v305, %v301
    %v410 = vpack.c.b16 %v310, %v306
    %v411 = vpack.c.b16 %v311, %v307
    %v412 = vpack.c.b16 %v312, %v308
    %v413 = vpack.c.b16 %v313, %v309
    %v414 = vpack.c.b16 %v318, %v314
    %v415 = vpack.c.b16 %v319, %v315
    %v416 = vpack.c.b16 %v320, %v316
    %v417 = vpack.c.b16 %v321, %v317
    %v418 = vpack.c.b16 %v326, %v322
    %v419 = vpack.c.b16 %v327, %v323
    %v420 = vpack.c.b16 %v328, %v324
    %v421 = vpack.c.b16 %v329, %v325
    %v422 = vpack.c.b16 %v334, %v330
    %v423 = vpack.c.b16 %v335, %v331
    %v424 = vpack.c.b16 %v336, %v332
    %v425 = vpack.c.b16 %v337, %v333
    %v426 = vpack.c.b16 %v342, %v338
    %v427 = vpack.c.b16 %v343, %v339
    %v428 = vpack.c.b16 %v344, %v340
    %v429 = vpack.c.b16 %v345, %v341
    %v430 = vpack.c.b16 %v350, %v346
    %v431 = vpack.c.b16 %v351, %v347
    %v432 = vpack.c.b16 %v352, %v348
    %v433 = vpack.c.b16 %v353, %v349
    %v434 = vpack.c.b16 %v358, %v354
    %v435 = vpack.c.b16 %v359, %v355
    %v436 = vpack.c.b16 %v360, %v356
    %v437 = vpack.c.b16 %v361, %v357
    %v438 = vpack.c.b16 %v366, %v362
    %v439 = vpack.c.b16 %v367, %v363
    %v440 = vpack.c.b16 %v368, %v364
    %v441 = vpack.c.b16 %v369, %v365
    %v442 = vpack.c.b16 %v374, %v370
    %v443 = vpack.c.b16 %v375, %v371
    %v444 = vpack.c.b16 %v376, %v372
    %v445 = vpack.c.b16 %v377, %v373
    %v446 = vpack.c.b16 %v382, %v378
    %v447 = vpack.c.b16 %v383, %v379
    %v448 = vpack.c.b16 %v384, %v380
    %v449 = vpack.c.b16 %v385, %v381
    %514 = vmatprep.subr.bf16.mxu0 %v387
    %515 = vmatpush1.bf16.msra.mxu0 %v386
    %516 = vmatprep.subr.bf16.mxu0 %v391
    %517 = vmatpush1.bf16.msra.mxu0 %v390
    %518 = vmatprep.subr.bf16.mxu0 %v395
    %519 = vmatpush1.bf16.msra.mxu0 %v394
    %520 = vmatprep.subr.bf16.mxu0 %v399
    %521 = vmatpush1.bf16.msra.mxu0 %v398
    %522 = vmatprep.subr.bf16.mxu0 %v403
    %523 = vmatpush1.bf16.msra.mxu0 %v402
    %524 = vmatprep.subr.bf16.mxu0 %v407
    %525 = vmatpush1.bf16.msra.mxu0 %v406
    %526 = vmatprep.subr.bf16.mxu0 %v411
    %527 = vmatpush1.bf16.msra.mxu0 %v410
    %528 = vmatprep.subr.bf16.mxu0 %v415
    %529 = vmatpush1.bf16.msra.mxu0 %v414
    %530 = vmatprep.subr.bf16.mxu0 %v419
    %531 = vmatpush1.bf16.msra.mxu0 %v418
    %532 = vmatprep.subr.bf16.mxu0 %v423
    %533 = vmatpush1.bf16.msra.mxu0 %v422
    %534 = vmatprep.subr.bf16.mxu0 %v427
    %535 = vmatpush1.bf16.msra.mxu0 %v426
    %536 = vmatprep.subr.bf16.mxu0 %v431
    %537 = vmatpush1.bf16.msra.mxu0 %v430
    %538 = vmatprep.subr.bf16.mxu0 %v435
    %539 = vmatpush1.bf16.msra.mxu0 %v434
    %540 = vmatprep.subr.bf16.mxu0 %v439
    %541 = vmatpush1.bf16.msra.mxu0 %v438
    %542 = vmatprep.subr.bf16.mxu0 %v443
    %543 = vmatpush1.bf16.msra.mxu0 %v442
    %544 = vmatprep.subr.bf16.mxu0 %v447
    %545 = vmatpush1.bf16.msra.mxu0 %v446
    %546 = vmatprep.mubr.bf16.mxu0 %v191
    %547 = vmatmul.mubr.bf16.gmra.mrb[0].mxu0 %v190
    %v548 = vpop.f32.mrb[0].mxu0
    %v549 = vadd.f32 %v170, %v548
    %v550 = vpop.f32.mrb[0].mxu0
    %v551 = vadd.f32 %v174, %v550
    %v552 = vpop.f32.mrb[0].mxu0
    %v553 = vpop.f32.mrb[0].mxu0
    %554 = vdwg.mxu0
    %555 = vmatprep.subr.bf16.mxu0 %v389
    %556 = vmatpush1.bf16.msra.mxu0 %v388
    %557 = vmatprep.subr.bf16.mxu0 %v393
    %558 = vmatpush1.bf16.msra.mxu0 %v392
    %559 = vmatprep.subr.bf16.mxu0 %v397
    %560 = vmatpush1.bf16.msra.mxu0 %v396
    %561 = vmatprep.subr.bf16.mxu0 %v401
    %562 = vmatpush1.bf16.msra.mxu0 %v400
    %563 = vmatprep.subr.bf16.mxu0 %v405
    %564 = vmatpush1.bf16.msra.mxu0 %v404
    %565 = vmatprep.subr.bf16.mxu0 %v409
    %566 = vmatpush1.bf16.msra.mxu0 %v408
    %567 = vmatprep.subr.bf16.mxu0 %v413
    %568 = vmatpush1.bf16.msra.mxu0 %v412
    %569 = vmatprep.subr.bf16.mxu0 %v417
    %570 = vmatpush1.bf16.msra.mxu0 %v416
    %571 = vmatprep.subr.bf16.mxu0 %v421
    %572 = vmatpush1.bf16.msra.mxu0 %v420
    %573 = vmatprep.subr.bf16.mxu0 %v425
    %574 = vmatpush1.bf16.msra.mxu0 %v424
    %575 = vmatprep.subr.bf16.mxu0 %v429
    %576 = vmatpush1.bf16.msra.mxu0 %v428
    %577 = vmatprep.subr.bf16.mxu0 %v433
    %578 = vmatpush1.bf16.msra.mxu0 %v432
    %579 = vmatprep.subr.bf16.mxu0 %v437
    %580 = vmatpush1.bf16.msra.mxu0 %v436
    %581 = vmatprep.subr.bf16.mxu0 %v441
    %582 = vmatpush1.bf16.msra.mxu0 %v440
    %583 = vmatprep.subr.bf16.mxu0 %v445
    %584 = vmatpush1.bf16.msra.mxu0 %v444
    %585 = vmatprep.subr.bf16.mxu0 %v449
    %586 = vmatpush1.bf16.msra.mxu0 %v448
    %587 = vmatprep.mubr.bf16.mxu0 %v191
    %588 = vmatmul.mubr.bf16.gmra.mrb[0].mxu0 %v190
    %v589 = vpop.f32.mrb[0].mxu0
    %v590 = vadd.f32 %v178, %v589
    %v591 = vpop.f32.mrb[0].mxu0
    %v592 = vadd.f32 %v182, %v591
    %v593 = vpop.f32.mrb[0].mxu0
    %v594 = vpop.f32.mrb[0].mxu0
    %595 = vdwg.mxu0
    %v596 = vmul.f32 %v549, 0.5
    %v597 = vtanh.pop %v596
    %v598 = vmul.f32 %v597, 0.5
    %v599 = vadd.f32 %v598, 0.5
    %v600 = vmul.f32 %v551, 0.5
    %v601 = vtanh.pop %v600
    %v602 = vmul.f32 %v601, 0.5
    %v603 = vadd.f32 %v602, 0.5
    %v604 = vtanh.pop %v590
    %v605 = vmul.f32 %v592, 0.5
    %v606 = vtanh.pop %v605
    %v607 = vmul.f32 %v606, 0.5
    %v608 = vadd.f32 %v607, 0.5
    %v609 = vld [vmem:[#allocation8] sm:$0xff]
    %v610 = vmul.f32 %v603, %v609
    %v611 = vmul.f32 %v599, %v604
    %v612 = vadd.f32 %v610, %v611
    %v613 = vtanh.pop %v612
    %v614 = vmul.f32 %v608, %v613
    %615 = vst [vmem:[#allocation13] sm:$0xff] %v612
    %616 = vst [vmem:[#allocation12] sm:$0xff] %v614
    // Predicated region
    $region50: #{tpu_custom_call.1} parent=1 // pred_check
      _
    $region51: #{tpu_custom_call.1} parent=1 // pred_check_branch
      %618 = sbr.rel (0) target = $region53
    $region52: #{tpu_custom_call.1} parent=1 // pred_region
      %s620 = ssub.s32 128, 128
      %621 = vsyncadd [#allocation5], %s620
      %s623 = sshll.u32 [#allocation12], 4
      %s624 = int_to_ptr.vmem [resolvable:$true] %s623
      %626 = dma.vmem_to_hbm [thread:$0]  %s624, 128, %s7, [#allocation5]
    $region53: #{tpu_custom_call.1} parent=1 // pred_fallthru
      _
    // Predicated region
    $region54: #{tpu_custom_call.1} parent=1 // pred_check
      _
    $region55: #{tpu_custom_call.1} parent=1 // pred_check_branch
      %628 = sbr.rel (0) target = $region57
    $region56: #{tpu_custom_call.1} parent=1 // pred_region
      %s630 = ssub.s32 128, 128
      %631 = vsyncadd [#allocation14], %s630
      %s633 = sshll.u32 [#allocation13], 4
      %s634 = int_to_ptr.vmem [resolvable:$true] %s633
      %636 = dma.vmem_to_hbm [thread:$0]  %s634, 128, %s8, [#allocation14]
    $region57: #{tpu_custom_call.1} parent=1 // pred_fallthru
      _
    // Predicated region
    $region58: #{tpu_custom_call.1} parent=1 // pred_check
      _
    $region59: #{tpu_custom_call.1} parent=1 // pred_check_branch
      %638 = sbr.rel (0) target = $region61
    $region60: #{tpu_custom_call.1} parent=1 // pred_region
      %639 = dma.done [#allocation5], 128
    $region61: #{tpu_custom_call.1} parent=1 // pred_fallthru
      _
    // Predicated region
    $region62: #{tpu_custom_call.1} parent=1 // pred_check
      _
    $region63: #{tpu_custom_call.1} parent=1 // pred_check_branch
      %641 = sbr.rel (0) target = $region65
    $region64: #{tpu_custom_call.1} parent=1 // pred_region
      %642 = dma.done [#allocation14], 128
    $region65: #{tpu_custom_call.1} parent=1 // pred_fallthru
      _
    %643 = vsyncpa [#allocation4], 1
    %644 = vsyncpa [#allocation7], 1
    %645 = vsyncpa [#allocation10], 1
    %646 = vsyncpa [#allocation5], 1
    %647 = vsyncpa [#allocation14], 1

</llo_original>
